<compile_context>
chip_gen: v5e
topology: v5e:2x2
jax: 0.10.0
libtpu: 0.0.40
codegen_flags: <defaults>
</compile_context>

<pallas_src>
import functools
import numpy as np
import jax
import jax.numpy as jnp
from jax.experimental import pallas as pl
from jax.experimental.pallas import tpu as pltpu


_LANE_QUBIT_CAP = 10  # 2**10 lanes -> largest (L, 2L) f32 operator is 8 MiB.


# ----------------------------------------------------------------------------
# Host-side gate expansion: (2, K, K) complex gate on `target` lane qubits
#   -> complex (L, L) right-multiply operator W with out_row = state_row @ W.
# ----------------------------------------------------------------------------
def _lane_operator_complex(gate_np, target, lane_qubits):
    L = 1 << lane_qubits
    g = np.asarray(gate_np, dtype=np.float64)
    gc = g[0] + 1j * g[1]                                   # (K, K) complex gate
    x = np.arange(L, dtype=np.int64)
    k_of_x = np.zeros(L, dtype=np.int64)                    # gate index of each lane state
    rest_of_x = x.copy()                                    # non-target lane-bit signature
    for j, q in enumerate(target):                          # target[0] -> gate-index LSB
        k_of_x |= ((x >> q) & 1) << j
        rest_of_x = rest_of_x & ~np.int64(1 << q)
    same_rest = rest_of_x[:, None] == rest_of_x[None, :]
    U = gc[k_of_x[:, None], k_of_x[None, :]] * same_rest    # U[x', x]
    return U.T                                              # out = s @ U^T


def _vmem_cap_bytes():
    try:
        cap = int(pltpu.get_tpu_info().vmem_capacity_bytes)
        return min(cap * 7 // 8, 100 * 1024 * 1024)
    except Exception:
        return 56 * 1024 * 1024                             # safe on v5e / v6e / v7x


# ----------------------------------------------------------------------------
# Fused circuit: one pallas_call, grid = (M tiles, num_gates); the state tile is the
# VMEM-resident output accumulator across the gate axis.
# ----------------------------------------------------------------------------
def fused_circuit_apply(state, targets, gates, num_qubits, *,
                        max_m_tile=1024, fuse_gates=True,
                        operand_dtype=jnp.float32):
    n = num_qubits
    if not targets:                                         # empty circuit
        return state
    max_target = max(max(t) for t in targets)
    lane_qubits = max(min(n, 7), max_target + 1)
    if lane_qubits > min(n, _LANE_QUBIT_CAP):
        # TODO(synk): sublane-side operator path for gates on very high qubits.
        raise NotImplementedError(
            f"gate target {max_target} needs lane_qubits={lane_qubits} > cap "
            f"{min(n, _LANE_QUBIT_CAP)}")
    L = 1 << lane_qubits
    L2 = 2 * L
    M = 1 << (n - lane_qubits)

    # ---- Host side: lift every gate to a complex lane operator, then fuse. ----
    ws = [_lane_operator_complex(np.asarray(g), t, lane_qubits)
          for g, t in zip(gates, targets)]
    if fuse_gates:
        # out = ((s @ W1) @ W2) ... = s @ (W1 @ W2 @ ...): whole circuit -> one operator.
        ws = [functools.reduce(np.matmul, ws)]
    ops_np = np.stack(
        [np.concatenate([w.real, w.imag], axis=1) for w in ws]   # (L, 2L) = [Wr | Wi]
    ).astype(np.float32)
    num_gates = ops_np.shape[0]
    ops = jnp.asarray(ops_np, dtype=operand_dtype)

    # ---- Tiling / VMEM budget --------------------------------------------------
    tm = min(M, max_m_tile)
    if M >= 16:                       # >=2 blocks on the parallel axis (v7x: 2 TCs/chip)
        tm = min(tm, M // 2)
    grid = (M // tm, num_gates)

    itemsize = jnp.dtype(operand_dtype).itemsize
    vmem_cap = _vmem_cap_bytes()
    tile_b = 2 * tm * L * itemsize
    gate_stack_b = num_gates * L * L2 * itemsize
    gates_resident = 2 * gate_stack_b <= vmem_cap // 2
    gate_block_b = gate_stack_b if gates_resident else L * L2 * itemsize
    # in + out blocks double-buffered, gate block double-buffered, plus headroom for
    # the two (tm, 2L) f32 matmul temporaries.
    need = 2 * 2 * tile_b + 2 * gate_block_b + 2 * tm * L2 * 4
    vmem_limit = int(min(max(2 * need, 32 * 1024 * 1024), vmem_cap))
    vmem_limit = max(vmem_limit, need + (2 << 20))

    if gates_resident:
        gate_spec = pl.BlockSpec((num_gates, L, L2), lambda i, g: (0, 0, 0))
    else:
        gate_spec = pl.BlockSpec((1, L, L2), lambda i, g: (g, 0, 0))

    def circuit_kernel(state_ref, gates_ref, out_ref):
        g = pl.program_id(1)

        @pl.when(g == 0)
        def _():
            out_ref[...] = state_ref[...]        # state tile -> resident accumulator

        w = gates_ref[g] if gates_resident else gates_ref[0]   # (L, 2L) = [Wr | Wi]
        # Complex right-multiply out = s @ (Wr + i Wi) as two lane-dense MXU matmuls.
        tr = jnp.dot(out_ref[0], w, preferred_element_type=jnp.float32)  # [sr@Wr | sr@Wi]
        ti = jnp.dot(out_ref[1], w, preferred_element_type=jnp.float32)  # [si@Wr | si@Wi]
        out_ref[0] = (tr[:, :L] - ti[:, L:]).astype(out_ref.dtype)
        out_ref[1] = (tr[:, L:] + ti[:, :L]).astype(out_ref.dtype)

    @jax.jit
    def run(state_nd, ops_arr):
        # (2, 2, ..., 2) -> (2, M, L): metadata-only reshape, low qubits on lanes.
        s3 = state_nd.reshape(2, M, L).astype(operand_dtype)
        out3 = pl.pallas_call(
            circuit_kernel,
            out_shape=jax.ShapeDtypeStruct((2, M, L), operand_dtype),
            grid_spec=pltpu.PrefetchScalarGridSpec(
                num_scalar_prefetch=0,
                grid=grid,
                in_specs=[
                    pl.BlockSpec((2, tm, L), lambda i, g: (0, i, 0)),
                    gate_spec,
                ],
                out_specs=pl.BlockSpec((2, tm, L), lambda i, g: (0, i, 0)),
            ),
            compiler_params=pltpu.CompilerParams(
                dimension_semantics=("parallel", "arbitrary"),
                vmem_limit_bytes=vmem_limit,
            ),
            input_output_aliases={0: 0},          # state in/out share the HBM buffer
        )(s3, ops_arr)
        return out3.reshape((2,) + (2,) * n).astype(state_nd.dtype)

    return run(state, ops)


# ----------------------------------------------------------------------------
# Pure-JAX reference (original per-gate permute/reshape semantics) for checking.
# ----------------------------------------------------------------------------
def _gate_apply_ref(state_mk, gate):
    sr, si = state_mk[0], state_mk[1]
    gr, gi = gate[0], gate[1]
    out_r = jnp.einsum("mk,jk->mj", sr, gr) - jnp.einsum("mk,jk->mj", si, gi)
    out_i = jnp.einsum("mk,jk->mj", sr, gi) + jnp.einsum("mk,jk->mj", si, gr)
    return jnp.stack([out_r, out_i], axis=0)


def quantum_circuit_forward_ref(state, targets, gates, num_qubits, num_qubits_gate):
    dims = list(range(num_qubits))
    K = 2 ** num_qubits_gate
    for target, gate in zip(targets, gates):
        target_axes = [num_qubits - 1 - q for q in target]
        target_axes = list(reversed(target_axes))
        permutation = [i for i in dims if i not in target_axes] + target_axes
        permutation = [0] + [i + 1 for i in permutation]
        inv_permutation = [0] * (num_qubits + 1)
        for i, d in enumerate(permutation):
            inv_permutation[d] = i
        state = jnp.transpose(state, permutation)
        state = state.reshape((2, -1, K))
        state = _gate_apply_ref(state, gate)
        state = state.reshape((2,) + (2,) * num_qubits)
        state = jnp.transpose(state, inv_permutation)
    return state


# ----------------------------------------------------------------------------
if __name__ == "__main__":
    num_qubits = 10            # 1024-amplitude state -> device layout (2, 8, 128)
    num_qubits_gate = 2        # 4x4 (2-qubit) gates
    K = 2 ** num_qubits_gate

    key = jax.random.PRNGKey(0)
    k_state, k_gates = jax.random.split(key)

    state = jax.random.normal(k_state, (2,) + (2,) * num_qubits, dtype=jnp.float32)
    state = state / jnp.sqrt(jnp.sum(state ** 2))

    targets = [[0, 1], [3, 5], [6, 2]]
    gates_arr = jax.random.normal(k_gates, (len(targets), 2, K, K), dtype=jnp.float32)
    gates = [gates_arr[i] for i in range(len(targets))]

    out = fused_circuit_apply(state, targets, gates, num_qubits)
    out = jax.block_until_ready(out)

    ref = quantum_circuit_forward_ref(state, targets, gates, num_qubits, num_qubits_gate)
    ref = jax.block_until_ready(ref)

    assert out.shape == (2,) + (2,) * num_qubits
    assert jnp.allclose(out, ref, atol=1e-4, rtol=1e-4), "mismatch vs reference"

    print("KERNEL_OK")
</pallas_src>

<mosaic_0001>
module attributes {stable_mosaic.version = 11 : i64} {
  func.func @circuit_kernel(%arg0: i32, %arg1: i32, %arg2: memref<2x8x128xf32, #tpu.memory_space<vmem>>, %arg3: memref<1x128x256xf32, #tpu.memory_space<vmem>>, %arg4: memref<2x8x128xf32, #tpu.memory_space<vmem>>) attributes {dimension_semantics = [#tpu.dimension_semantics<parallel>, #tpu.dimension_semantics<arbitrary>], iteration_bounds = array<i64: 1, 1>, scalar_prefetch = 0 : i64, scratch_operands = 0 : i64, tpu.core_type = #tpu.core_type<tc>, window_params = [{transform_indices = @transform_0, window_bounds = array<i64: 2, 8, 128>}, {pipeline_mode = #tpu.pipeline_mode<synchronous>, transform_indices = @transform_1, window_bounds = array<i64: 1, 128, 256>}, {transform_indices = @transform_2, window_bounds = array<i64: 2, 8, 128>}]} {
    %c0_i32 = arith.constant 0 : i32
    %0 = arith.cmpi eq, %arg1, %c0_i32 : i32
    %1 = arith.extui %0 : i1 to i32
    %c0_i32_0 = arith.constant 0 : i32
    %2 = arith.cmpi ne, %1, %c0_i32_0 : i32
    scf.if %2 {
      %c0_14 = arith.constant 0 : index
      %c0_15 = arith.constant 0 : index
      %c0_16 = arith.constant 0 : index
      %24 = vector.load %arg2[%c0_14, %c0_15, %c0_16] : memref<2x8x128xf32, #tpu.memory_space<vmem>>, vector<2x8x128xf32>
      %c0_17 = arith.constant 0 : index
      %c0_18 = arith.constant 0 : index
      %c0_19 = arith.constant 0 : index
      %25 = vector.load %arg4[%c0_17, %c0_18, %c0_19] : memref<2x8x128xf32, #tpu.memory_space<vmem>>, vector<2x8x128xf32>
      tpu.vector_store %arg4[%c0_17, %c0_18, %c0_19], %24 {strides = array<i32>} : memref<2x8x128xf32, #tpu.memory_space<vmem>>, vector<2x8x128xf32>,
    } else {
    }
    %3 = arith.index_cast %arg1 : i32 to index
    %c0 = arith.constant 0 : index
    %c0_1 = arith.constant 0 : index
    %4 = vector.load %arg3[%3, %c0, %c0_1] : memref<1x128x256xf32, #tpu.memory_space<vmem>>, vector<1x128x256xf32>
    %5 = vector.shape_cast %4 : vector<1x128x256xf32> to vector<128x256xf32>
    %c0_2 = arith.constant 0 : index
    %c0_3 = arith.constant 0 : index
    %c0_4 = arith.constant 0 : index
    %6 = vector.load %arg4[%c0_2, %c0_3, %c0_4] : memref<2x8x128xf32, #tpu.memory_space<vmem>>, vector<1x8x128xf32>
    %7 = vector.shape_cast %6 : vector<1x8x128xf32> to vector<8x128xf32>
    %cst = arith.constant dense<0.000000e+00> : vector<8x256xf32>
    %8 = tpu.matmul %7, %5, %cst {dimension_numbers = #tpu.dot_dimension_numbers<[1], [0], [0], [1], [0, 0, 1, 1], [], []>} : vector<8x128xf32>, vector<128x256xf32>, vector<8x256xf32> -> vector<8x256xf32>
    %c1 = arith.constant 1 : index
    %c0_5 = arith.constant 0 : index
    %c0_6 = arith.constant 0 : index
    %9 = vector.load %arg4[%c1, %c0_5, %c0_6] : memref<2x8x128xf32, #tpu.memory_space<vmem>>, vector<1x8x128xf32>
    %10 = vector.shape_cast %9 : vector<1x8x128xf32> to vector<8x128xf32>
    %cst_7 = arith.constant dense<0.000000e+00> : vector<8x256xf32>
    %11 = tpu.matmul %10, %5, %cst_7 {dimension_numbers = #tpu.dot_dimension_numbers<[1], [0], [0], [1], [0, 0, 1, 1], [], []>} : vector<8x128xf32>, vector<128x256xf32>, vector<8x256xf32> -> vector<8x256xf32>
    %12 = vector.extract_strided_slice %8 {offsets = [0, 0], sizes = [8, 128], strides = [1, 1]} : vector<8x256xf32> to vector<8x128xf32>
    %13 = vector.extract_strided_slice %11 {offsets = [0, 128], sizes = [8, 128], strides = [1, 1]} : vector<8x256xf32> to vector<8x128xf32>
    %14 = arith.subf %12, %13 : vector<8x128xf32>
    %c0_8 = arith.constant 0 : index
    %c0_9 = arith.constant 0 : index
    %c0_10 = arith.constant 0 : index
    %15 = vector.load %arg4[%c0_8, %c0_9, %c0_10] : memref<2x8x128xf32, #tpu.memory_space<vmem>>, vector<1x8x128xf32>
    %16 = vector.shape_cast %15 : vector<1x8x128xf32> to vector<8x128xf32>
    %17 = vector.shape_cast %14 : vector<8x128xf32> to vector<1x8x128xf32>
    tpu.vector_store %arg4[%c0_8, %c0_9, %c0_10], %17 {strides = array<i32>} : memref<2x8x128xf32, #tpu.memory_space<vmem>>, vector<1x8x128xf32>,
    %18 = vector.extract_strided_slice %8 {offsets = [0, 128], sizes = [8, 128], strides = [1, 1]} : vector<8x256xf32> to vector<8x128xf32>
    %19 = vector.extract_strided_slice %11 {offsets = [0, 0], sizes = [8, 128], strides = [1, 1]} : vector<8x256xf32> to vector<8x128xf32>
    %20 = arith.addf %18, %19 : vector<8x128xf32>
    %c1_11 = arith.constant 1 : index
    %c0_12 = arith.constant 0 : index
    %c0_13 = arith.constant 0 : index
    %21 = vector.load %arg4[%c1_11, %c0_12, %c0_13] : memref<2x8x128xf32, #tpu.memory_space<vmem>>, vector<1x8x128xf32>
    %22 = vector.shape_cast %21 : vector<1x8x128xf32> to vector<8x128xf32>
    %23 = vector.shape_cast %20 : vector<8x128xf32> to vector<1x8x128xf32>
    tpu.vector_store %arg4[%c1_11, %c0_12, %c0_13], %23 {strides = array<i32>} : memref<2x8x128xf32, #tpu.memory_space<vmem>>, vector<1x8x128xf32>,
    return
  }
  func.func @transform_0(%arg0: i32, %arg1: i32) -> (i32, i32, i32) {
    %c0_i32 = arith.constant 0 : i32
    %c0_i32_0 = arith.constant 0 : i32
    %c0_i32_1 = arith.constant 0 : i32
    return %c0_i32, %arg0, %c0_i32_0 : i32, i32, i32
  }
  func.func @transform_1(%arg0: i32, %arg1: i32) -> (i32, i32, i32) {
    %c0_i32 = arith.constant 0 : i32
    %c0_i32_0 = arith.constant 0 : i32
    %c0_i32_1 = arith.constant 0 : i32
    %c0_i32_2 = arith.constant 0 : i32
    return %c0_i32, %c0_i32_0, %c0_i32_1 : i32, i32, i32
  }
  func.func @transform_2(%arg0: i32, %arg1: i32) -> (i32, i32, i32) {
    %c0_i32 = arith.constant 0 : i32
    %c0_i32_0 = arith.constant 0 : i32
    %c0_i32_1 = arith.constant 0 : i32
    return %c0_i32, %arg0, %c0_i32_0 : i32, i32, i32
  }
}

</mosaic_0001>

<llo_original>
// kernel: run.1
$region0: #{run.1}
  #allocation0 [shape = 'u32[]', space=smem, size = 0x4, offset = 0x4, fixed_abs, tag = 'smem constant byte address 0x4 - core index']
  #allocation1 [shape = 'u32[72,128]{1,0:T(1,128)}', space=vmem, size = 0x9000, scoped, tag = 'internal scratch']
  %s0 = inlined_call_operand.vmem [shape: f32[2,8,128], index: 0, kind: input, shape index: {}, may-alias: {0,2}]
  %s1 = inlined_call_operand.vmem [shape: f32[1,128,256], index: 1, kind: input, shape index: {}]
  %s2 = inlined_call_operand.vmem [shape: f32[2,8,128], index: 2, kind: output, shape index: {}, may-alias: {0,2}]
  %s3 = sld [smem:[#allocation0]]
  $region22: #{run.1} parent=0
    _
  %s5 = ssub.s32 1, %s3
  %s6 = scalar_select 0, %s5, %s3
  // Predicated region
  $region2: #{run.1} parent=0 // pred_check
    _
  $region3: #{run.1} parent=0 // pred_check_branch
    %8 = sbr.rel (0) target = $region5
  $region4: #{run.1} parent=0 // pred_region
    _
  $region5: #{run.1} parent=0 // pred_fallthru
    _
  // Predicated region
  $region6: #{run.1} parent=0 // pred_check
    _
  $region7: #{run.1} parent=0 // pred_check_branch
    %10 = sbr.rel (0) target = $region9
  $region8: #{run.1} parent=0 // pred_region
    _
  $region9: #{run.1} parent=0 // pred_fallthru
    _
  %p11 = scmp.eq.s32.totalorder 0, 0
  // Predicated region
  $region10: #{run.1} parent=0 // pred_check
    %p12 = pneg %p11
  $region11: #{run.1} parent=0 // pred_check_branch
    %14 = sbr.rel (%p12) target = $region13
  $region12: #{run.1} parent=0 // pred_region
    %v15 = vld [vmem:[%s0] sm:$0xff]
    %v16 = vld [vmem:[%s0 + $0x8] sm:$0xff]
    %17 = vst [vmem:[%s2] sm:$0xff] %v15
    %18 = vst [vmem:[%s2 + $0x8] sm:$0xff] %v16
  $region13: #{run.1} parent=0 // pred_fallthru
    _
  %s19 = smul.u32 0, 32
  %s20 = smul.addr %s19, 8
  %s21 = scalar_lea.vmem %s1, %s20
  %v22 = vld [vmem:[%s21] sm:$0xff]
  %v23 = vld [vmem:[%s21 + $0x8] sm:$0xff]
  %v24 = vld [vmem:[%s21 + $0x10] sm:$0xff]
  %v25 = vld [vmem:[%s21 + $0x18] sm:$0xff]
  %v26 = vld [vmem:[%s21 + $0x20] sm:$0xff]
  %v27 = vld [vmem:[%s21 + $0x28] sm:$0xff]
  %v28 = vld [vmem:[%s21 + $0x30] sm:$0xff]
  %v29 = vld [vmem:[%s21 + $0x38] sm:$0xff]
  %v30 = vld [vmem:[%s21 + $0x40] sm:$0xff]
  %v31 = vld [vmem:[%s21 + $0x48] sm:$0xff]
  %v32 = vld [vmem:[%s21 + $0x50] sm:$0xff]
  %v33 = vld [vmem:[%s21 + $0x58] sm:$0xff]
  %v34 = vld [vmem:[%s21 + $0x60] sm:$0xff]
  %v35 = vld [vmem:[%s21 + $0x68] sm:$0xff]
  %v36 = vld [vmem:[%s21 + $0x70] sm:$0xff]
  %v37 = vld [vmem:[%s21 + $0x78] sm:$0xff]
  %v38 = vld [vmem:[%s21 + $0x80] sm:$0xff]
  %v39 = vld [vmem:[%s21 + $0x88] sm:$0xff]
  %v40 = vld [vmem:[%s21 + $0x90] sm:$0xff]
  %v41 = vld [vmem:[%s21 + $0x98] sm:$0xff]
  %v42 = vld [vmem:[%s21 + $0xa0] sm:$0xff]
  %v43 = vld [vmem:[%s21 + $0xa8] sm:$0xff]
  %v44 = vld [vmem:[%s21 + $0xb0] sm:$0xff]
  %v45 = vld [vmem:[%s21 + $0xb8] sm:$0xff]
  %v46 = vld [vmem:[%s21 + $0xc0] sm:$0xff]
  %v47 = vld [vmem:[%s21 + $0xc8] sm:$0xff]
  %v48 = vld [vmem:[%s21 + $0xd0] sm:$0xff]
  %v49 = vld [vmem:[%s21 + $0xd8] sm:$0xff]
  %v50 = vld [vmem:[%s21 + $0xe0] sm:$0xff]
  %v51 = vld [vmem:[%s21 + $0xe8] sm:$0xff]
  %v52 = vld [vmem:[%s21 + $0xf0] sm:$0xff]
  %v53 = vld [vmem:[%s21 + $0xf8] sm:$0xff]
  %v54 = vld [vmem:[%s2] sm:$0xff]
  %55 = vmatpush.msra.mxu0 %v52
  %56 = vmatpush.msra.mxu0 %v50
  %57 = vmatpush.msra.mxu0 %v48
  %58 = vmatpush.msra.mxu0 %v46
  %59 = vmatpush.msra.mxu0 %v44
  %60 = vmatpush.msra.mxu0 %v42
  %61 = vmatpush.msra.mxu0 %v40
  %62 = vmatpush.msra.mxu0 %v38
  %63 = vmatpush.msra.mxu0 %v36
  %64 = vmatpush.msra.mxu0 %v34
  %65 = vmatpush.msra.mxu0 %v32
  %66 = vmatpush.msra.mxu0 %v30
  %67 = vmatpush.msra.mxu0 %v28
  %68 = vmatpush.msra.mxu0 %v26
  %69 = vmatpush.msra.mxu0 %v24
  %70 = vmatpush.msra.mxu0 %v22
  %71 = vmatmul.f32.gmra.mxu0 %v54
  %v72 = vpop.f32.mrf.mxu0
  %v73 = vadd.f32 0.0, %v72
  %74 = vdwg.mxu0
  %75 = vmatpush.msra.mxu0 %v53
  %76 = vmatpush.msra.mxu0 %v51
  %77 = vmatpush.msra.mxu0 %v49
  %78 = vmatpush.msra.mxu0 %v47
  %79 = vmatpush.msra.mxu0 %v45
  %80 = vmatpush.msra.mxu0 %v43
  %81 = vmatpush.msra.mxu0 %v41
  %82 = vmatpush.msra.mxu0 %v39
  %83 = vmatpush.msra.mxu0 %v37
  %84 = vmatpush.msra.mxu0 %v35
  %85 = vmatpush.msra.mxu0 %v33
  %86 = vmatpush.msra.mxu0 %v31
  %87 = vmatpush.msra.mxu0 %v29
  %88 = vmatpush.msra.mxu0 %v27
  %89 = vmatpush.msra.mxu0 %v25
  %90 = vmatpush.msra.mxu0 %v23
  %91 = vmatmul.f32.gmra.mxu0 %v54
  %v92 = vpop.f32.mrf.mxu0
  %v93 = vadd.f32 0.0, %v92
  %94 = vdwg.mxu0
  %s95 = scalar_lea.vmem %s2, 8
  %v96 = vld [vmem:[%s95] sm:$0xff]
  %97 = vmatpush.msra.mxu0 %v52
  %98 = vmatpush.msra.mxu0 %v50
  %99 = vmatpush.msra.mxu0 %v48
  %100 = vmatpush.msra.mxu0 %v46
  %101 = vmatpush.msra.mxu0 %v44
  %102 = vmatpush.msra.mxu0 %v42
  %103 = vmatpush.msra.mxu0 %v40
  %104 = vmatpush.msra.mxu0 %v38
  %105 = vmatpush.msra.mxu0 %v36
  %106 = vmatpush.msra.mxu0 %v34
  %107 = vmatpush.msra.mxu0 %v32
  %108 = vmatpush.msra.mxu0 %v30
  %109 = vmatpush.msra.mxu0 %v28
  %110 = vmatpush.msra.mxu0 %v26
  %111 = vmatpush.msra.mxu0 %v24
  %112 = vmatpush.msra.mxu0 %v22
  %113 = vmatmul.f32.gmra.mxu0 %v96
  %v114 = vpop.f32.mrf.mxu0
  %v115 = vadd.f32 0.0, %v114
  %116 = vdwg.mxu0
  %117 = vmatpush.msra.mxu0 %v53
  %118 = vmatpush.msra.mxu0 %v51
  %119 = vmatpush.msra.mxu0 %v49
  %120 = vmatpush.msra.mxu0 %v47
  %121 = vmatpush.msra.mxu0 %v45
  %122 = vmatpush.msra.mxu0 %v43
  %123 = vmatpush.msra.mxu0 %v41
  %124 = vmatpush.msra.mxu0 %v39
  %125 = vmatpush.msra.mxu0 %v37
  %126 = vmatpush.msra.mxu0 %v35
  %127 = vmatpush.msra.mxu0 %v33
  %128 = vmatpush.msra.mxu0 %v31
  %129 = vmatpush.msra.mxu0 %v29
  %130 = vmatpush.msra.mxu0 %v27
  %131 = vmatpush.msra.mxu0 %v25
  %132 = vmatpush.msra.mxu0 %v23
  %133 = vmatmul.f32.gmra.mxu0 %v96
  %v134 = vpop.f32.mrf.mxu0
  %v135 = vadd.f32 0.0, %v134
  %136 = vdwg.mxu0
  %v137 = vsub.f32 %v73, %v135
  %138 = vst [vmem:[%s2] sm:$0xff] %v137
  %v139 = vadd.f32 %v93, %v115
  %140 = vst [vmem:[%s95] sm:$0xff] %v139
  // Predicated region
  $region14: #{run.1} parent=0 // pred_check
    _
  $region15: #{run.1} parent=0 // pred_check_branch
    %142 = sbr.rel (0) target = $region17
  $region16: #{run.1} parent=0 // pred_region
    _
  $region17: #{run.1} parent=0 // pred_fallthru
    _
  // Predicated region
  $region18: #{run.1} parent=0 // pred_check
    _
  $region19: #{run.1} parent=0 // pred_check_branch
    %144 = sbr.rel (0) target = $region21
  $region20: #{run.1} parent=0 // pred_region
    _
  $region21: #{run.1} parent=0 // pred_fallthru
    _

</llo_original>
